<compile_context>
chip_gen: v5e
topology: v5e:2x2
jax: 0.10.0
libtpu: 0.0.40
codegen_flags: <defaults>
</compile_context>

<pallas_src>
import jax
import jax.numpy as jnp
from jax.experimental import pallas as pl
from jax.experimental.pallas import tpu as pltpu

# ---- problem sizes (small, consistent with a [2, 4, 16, 16] image input) ----
B, C, H, W = 2, 4, 16, 16
D = C * H * W          # 1024 -> lane-dense (multiple of 128)
S = 1                  # num_samples per batch element


def dirac_kernel(x_ref, z_ref, logp_ref):
    # x_ref:    (B, 1, D)  conditioning variable (flattened image, unit sample dim)
    # z_ref:    (B, S, D)  output sample: x tiled along the sample axis
    # logp_ref: (B, S)     output log q(z|x) == 0 for a Dirac measure
    z_ref[...] = jnp.broadcast_to(x_ref[...], z_ref.shape).astype(z_ref.dtype)
    logp_ref[...] = jnp.zeros(logp_ref.shape, logp_ref.dtype)


def dirac_forward(x_nchw, num_samples=S):
    """x_nchw: (B, C, H, W). Returns (z: (B, S, D), log_p: (B, S))."""
    b = x_nchw.shape[0]
    x_flat = x_nchw.reshape(b, 1, -1)      # (B, 1, D), matches torch .view(B, -1)
    d = x_flat.shape[-1]

    vmem = pltpu.MemorySpace.VMEM
    itemsize = jnp.dtype(x_flat.dtype).itemsize
    bytes_accessed = (b * d + b * num_samples * d) * itemsize + b * num_samples * 4

    return pl.pallas_call(
        dirac_kernel,
        out_shape=(
            jax.ShapeDtypeStruct((b, num_samples, d), x_flat.dtype),
            jax.ShapeDtypeStruct((b, num_samples), jnp.float32),
        ),
        in_specs=[
            pl.BlockSpec(memory_space=vmem),   # x (B, 1, D)
        ],
        out_specs=(
            pl.BlockSpec(memory_space=vmem),   # z     (B, S, D)
            pl.BlockSpec(memory_space=vmem),   # log_p (B, S)
        ),
        # Zero-flop, ~16 KiB copy: tell the scheduler this call is tiny.
        cost_estimate=pl.CostEstimate(
            flops=0, transcendentals=0, bytes_accessed=bytes_accessed),
    )(x_flat)


def reference_forward(x_nchw, num_samples=S):
    x_flat = x_nchw.reshape(x_nchw.shape[0], -1)
    z = jnp.broadcast_to(
        x_flat[:, None, :], (x_flat.shape[0], num_samples, x_flat.shape[1]))
    log_p = jnp.zeros((x_flat.shape[0], num_samples), jnp.float32)
    return z, log_p


if __name__ == "__main__":
    key = jax.random.PRNGKey(0)
    x = jax.random.normal(key, (B, C, H, W), dtype=jnp.float32)

    z, log_p = dirac_forward(x)
    jax.block_until_ready((z, log_p))

    z_ref, log_p_ref = reference_forward(x)
    assert z.shape == (B, S, D) and log_p.shape == (B, S)
    assert jnp.array_equal(z, z_ref)
    assert jnp.array_equal(log_p, log_p_ref)

    print("KERNEL_OK")
</pallas_src>

<mosaic_0001>
module attributes {stable_mosaic.version = 11 : i64} {
  func.func @dirac_kernel(%arg0: memref<2x1x1024xf32, #tpu.memory_space<vmem>>, %arg1: memref<2x1x1024xf32, #tpu.memory_space<vmem>>, %arg2: memref<2x1xf32, #tpu.memory_space<vmem>>) attributes {dimension_semantics = [], scalar_prefetch = 0 : i64, scratch_operands = 0 : i64, tpu.core_type = #tpu.core_type<tc>} {
    %c0 = arith.constant 0 : index
    %c0_0 = arith.constant 0 : index
    %c0_1 = arith.constant 0 : index
    %0 = vector.load %arg0[%c0, %c0_0, %c0_1] : memref<2x1x1024xf32, #tpu.memory_space<vmem>>, vector<2x1x1024xf32>
    %c0_2 = arith.constant 0 : index
    %c0_3 = arith.constant 0 : index
    %c0_4 = arith.constant 0 : index
    %1 = vector.load %arg1[%c0_2, %c0_3, %c0_4] : memref<2x1x1024xf32, #tpu.memory_space<vmem>>, vector<2x1x1024xf32>
    tpu.vector_store %arg1[%c0_2, %c0_3, %c0_4], %0 {strides = array<i32>} : memref<2x1x1024xf32, #tpu.memory_space<vmem>>, vector<2x1x1024xf32>,
    %cst = arith.constant 0.000000e+00 : f32
    %2 = vector.broadcast %cst : f32 to vector<2x1xf32>
    %c0_5 = arith.constant 0 : index
    %c0_6 = arith.constant 0 : index
    %3 = vector.load %arg2[%c0_5, %c0_6] : memref<2x1xf32, #tpu.memory_space<vmem>>, vector<2x1xf32>
    tpu.vector_store %arg2[%c0_5, %c0_6], %2 {strides = array<i32>} : memref<2x1xf32, #tpu.memory_space<vmem>>, vector<2x1xf32>,
    return
  }
}

</mosaic_0001>

<llo_original>
// kernel: tpu_custom_call.1
$region0: #{tpu_custom_call.1}
  #allocation0 [shape = 'u32[]', space=smem, size = 0x4, offset = 0x4, fixed_abs, tag = 'smem constant byte address 0x4 - core index']
  #allocation1 [shape = 'u32[72,128]{1,0:T(1,128)}', space=vmem, size = 0x9000, scoped, tag = 'internal scratch']
  %s0 = inlined_call_operand.hbm [shape: f32[2,1,1024], index: 0, kind: input, shape index: {}]
  %s1 = inlined_call_operand.hbm [shape: f32[2,1,1024], index: 1, kind: output, shape index: {0}]
  %s2 = inlined_call_operand.vmem [shape: f32[2,1], index: 2, kind: output, shape index: {1}]
  %3 = xla_tuple %s1, %s2
  %s4 = sld [smem:[#allocation0]]
  $region26: #{tpu_custom_call.1} parent=0
    _
  %s6 = ssub.s32 1, %s4
  %s7 = scalar_select 0, %s6, %s4
  $region1: #{tpu_custom_call.1} parent=0
    #allocation2 [shape = 'u8[8192]{0}', space=vmem, size = 0x2000, scoped, tag = 'input window, operand 0, single buffered']
    #allocation3 [shape = 's32[1]{0}', space=sflag, size = 0x4, scoped, tag = 'scoped memory for tpu_custom_call.1']
    #allocation4 [shape = 's32[1]{0}', space=sflag, size = 0x4, scoped, tag = 'scoped memory for tpu_custom_call.1']
    #allocation5 [shape = 'u8[8192]{0}', space=vmem, size = 0x2000, scoped, tag = 'output window, operand 0, single buffered']
    %8 = vsyncpa [#allocation3], 0
    %9 = vsyncpa [#allocation4], 0
    // Predicated region
    $region2: #{tpu_custom_call.1} parent=1 // pred_check
      _
    $region3: #{tpu_custom_call.1} parent=1 // pred_check_branch
      %11 = sbr.rel (0) target = $region5
    $region4: #{tpu_custom_call.1} parent=1 // pred_region
      %13 = vsyncadd [#allocation3], 0
      %s14 = sshll.u32 %s0, 4
      %s15 = int_to_ptr.hbm [resolvable:$true] %s14
      %s16 = sshll.u32 [#allocation2], 4
      %s17 = int_to_ptr.vmem [resolvable:$true] %s16
      %22 = dma.hbm_to_vmem [thread:$0]  %s15, 256, %s17, [#allocation3], 128, 128, 8
    $region5: #{tpu_custom_call.1} parent=1 // pred_fallthru
      _
    // Predicated region
    $region6: #{tpu_custom_call.1} parent=1 // pred_check
      _
    $region7: #{tpu_custom_call.1} parent=1 // pred_check_branch
      %24 = sbr.rel (0) target = $region9
    $region8: #{tpu_custom_call.1} parent=1 // pred_region
      %26 = dma.done [#allocation3], 256
    $region9: #{tpu_custom_call.1} parent=1 // pred_fallthru
      _
    %v27 = vld [vmem:[#allocation2] sm:$0xff]
    %v28 = vld [vmem:[#allocation2 + $0x8] sm:$0xff]
    %29 = vst [vmem:[#allocation5] sm:$0xff] %v27
    %30 = vst [vmem:[#allocation5 + $0x8] sm:$0xff] %v28
    %vm31 = vcmask 1024
    %32 = vst.msk [vmem:[%s2] sm:$0x3] %vm31, 0.0
    // Predicated region
    $region10: #{tpu_custom_call.1} parent=1 // pred_check
      _
    $region11: #{tpu_custom_call.1} parent=1 // pred_check_branch
      %34 = sbr.rel (0) target = $region13
    $region12: #{tpu_custom_call.1} parent=1 // pred_region
      %36 = vsyncadd [#allocation4], 0
      %s37 = sshll.u32 [#allocation5], 4
      %s38 = int_to_ptr.vmem [resolvable:$true] %s37
      %s39 = sshll.u32 %s1, 4
      %s40 = int_to_ptr.hbm [resolvable:$true] %s39
      %45 = dma.vmem_to_hbm [thread:$0]  %s38, 256, %s40, [#allocation4], 128, 128, 8
    $region13: #{tpu_custom_call.1} parent=1 // pred_fallthru
      _
    // Predicated region
    $region14: #{tpu_custom_call.1} parent=1 // pred_check
      _
    $region15: #{tpu_custom_call.1} parent=1 // pred_check_branch
      %47 = sbr.rel (0) target = $region17
    $region16: #{tpu_custom_call.1} parent=1 // pred_region
      _
    $region17: #{tpu_custom_call.1} parent=1 // pred_fallthru
      _
    // Predicated region
    $region18: #{tpu_custom_call.1} parent=1 // pred_check
      _
    $region19: #{tpu_custom_call.1} parent=1 // pred_check_branch
      %49 = sbr.rel (0) target = $region21
    $region20: #{tpu_custom_call.1} parent=1 // pred_region
      %51 = dma.done [#allocation4], 256
    $region21: #{tpu_custom_call.1} parent=1 // pred_fallthru
      _
    // Predicated region
    $region22: #{tpu_custom_call.1} parent=1 // pred_check
      _
    $region23: #{tpu_custom_call.1} parent=1 // pred_check_branch
      %53 = sbr.rel (0) target = $region25
    $region24: #{tpu_custom_call.1} parent=1 // pred_region
      _
    $region25: #{tpu_custom_call.1} parent=1 // pred_fallthru
      _
    %54 = vsyncpa [#allocation3], 1
    %55 = vsyncpa [#allocation4], 1

</llo_original>
